<compile_context>
chip_gen: v5e
topology: v5e:2x2
jax: 0.10.0
libtpu: 0.0.40
codegen_flags: <defaults>
</compile_context>

<pallas_src>
import functools

import jax
import jax.numpy as jnp
from jax.experimental import pallas as pl
from jax.experimental.pallas import tpu as pltpu

PACK = 8          # samples packed per row: 8*10 = 80 input lanes, 8*7 = 56 output lanes
F_IN = 10
F_HID = 10
F_OUT = 7


def mlp_kernel(x_ref, w1_ref, b1_ref, w2_ref, b2_ref, o_ref):
    # x_ref: (tbr, 80) — 8 samples per row, features contiguous per sample.
    # w1_ref: (80, 80) = kron(I8, W_hidden^T); w2_ref: (80, 56) = kron(I8, W_output^T)
    x = x_ref[...]
    h = jnp.dot(x, w1_ref[...], preferred_element_type=jnp.float32) + b1_ref[...]
    h = 0.5 * jnp.tanh(0.5 * h) + 0.5        # sigmoid: one EUP op per vreg
    y = jnp.dot(h, w2_ref[...], preferred_element_type=jnp.float32) + b2_ref[...]
    y = 0.5 * jnp.tanh(0.5 * y) + 0.5
    o_ref[...] = y.astype(o_ref.dtype)


@functools.partial(jax.jit, static_argnames=("block_b",))
def seven_segment_mlp(x, w_hidden, b_hidden, w_output, b_output, *,
                      block_b=32768):
    """x: (B, 10); PyTorch nn.Linear layouts: w_hidden (10,10), b_hidden (10,),
    w_output (7,10), b_output (7,). Returns (B, 7)."""
    x = jnp.asarray(x, jnp.float32)
    B, F = x.shape
    assert F == F_IN, "SevenSegmentMLP expects 10 input features"

    # Pack 8 samples per row (free row-major reshape).  Only a ragged B needs
    # a (tiny) pad; there is never a pad up to the tile size.
    b_pad = pl.cdiv(B, PACK) * PACK
    if b_pad != B:
        x = jnp.pad(x, ((0, b_pad - B), (0, 0)))
    rows = b_pad // PACK
    x_packed = x.reshape(rows, PACK * F_IN)                  # (rows, 80)

    # Block-diagonal weights: one plain matmul applies the layer to all 8
    # packed samples at once.  Biases tile across the packed lane groups.
    w1 = jnp.kron(jnp.eye(PACK, dtype=jnp.float32),
                  jnp.asarray(w_hidden, jnp.float32).T)      # (80, 80)
    w2 = jnp.kron(jnp.eye(PACK, dtype=jnp.float32),
                  jnp.asarray(w_output, jnp.float32).T)      # (80, 56)
    b1 = jnp.tile(jnp.asarray(b_hidden, jnp.float32), PACK)[None, :]   # (1, 80)
    b2 = jnp.tile(jnp.asarray(b_output, jnp.float32), PACK)[None, :]   # (1, 56)

    # Rows per grid step.
    tbr = block_b // PACK
    if rows <= tbr:
        tbr = rows                      # single full-extent block
    else:
        assert block_b % (8 * PACK) == 0, "block_b must be a multiple of 64"
    grid = (pl.cdiv(rows, tbr),)        # ragged last block masked by Pallas

    y_packed = pl.pallas_call(
        mlp_kernel,
        out_shape=jax.ShapeDtypeStruct((rows, PACK * F_OUT), jnp.float32),
        grid=grid,
        in_specs=[
            pl.BlockSpec((tbr, PACK * F_IN), lambda i: (i, 0)),          # x streams
            pl.BlockSpec((PACK * F_IN, PACK * F_HID), lambda i: (0, 0)), # weights/biases
            pl.BlockSpec((1, PACK * F_HID), lambda i: (0, 0)),           # stay VMEM-resident
            pl.BlockSpec((PACK * F_HID, PACK * F_OUT), lambda i: (0, 0)),
            pl.BlockSpec((1, PACK * F_OUT), lambda i: (0, 0)),
        ],
        out_specs=pl.BlockSpec((tbr, PACK * F_OUT), lambda i: (i, 0)),
        compiler_params=pltpu.CompilerParams(
            dimension_semantics=("parallel",)),   # megacore shard on v7x
    )(x_packed, w1, b1, w2, b2)

    y = y_packed.reshape(b_pad, F_OUT)            # free row-major reshape
    return y[:B] if b_pad != B else y


if __name__ == "__main__":
    key = jax.random.PRNGKey(0)
    kx, k1, k2, k3, k4 = jax.random.split(key, 5)

    # Small shapes that still exercise the pack-pad + ragged-tile paths:
    # B=203 -> padded to 208 -> 26 packed rows; block_b=128 -> 16 rows/step,
    # grid=(2,) with a ragged (masked) last block.
    B = 203
    x = jax.random.normal(kx, (B, 10), dtype=jnp.float32)

    # Deterministic params (PyTorch nn.Linear shapes: weight (out, in), bias (out,))
    w_hidden = jax.random.normal(k1, (10, 10), dtype=jnp.float32) * 0.3
    b_hidden = jax.random.normal(k2, (10,), dtype=jnp.float32) * 0.1
    w_output = jax.random.normal(k3, (7, 10), dtype=jnp.float32) * 0.3
    b_output = jax.random.normal(k4, (7,), dtype=jnp.float32) * 0.1

    out = seven_segment_mlp(x, w_hidden, b_hidden, w_output, b_output,
                            block_b=128)
    out = jax.block_until_ready(out)

    # Pure-JAX reference with PyTorch forward semantics.
    ref = jax.nn.sigmoid(x @ w_hidden.T + b_hidden)
    ref = jax.nn.sigmoid(ref @ w_output.T + b_output)
    assert out.shape == (B, 7)
    assert jnp.allclose(out, ref, atol=1e-4, rtol=1e-4), "mismatch vs reference"

    print("KERNEL_OK")
</pallas_src>

<mosaic_0001>
module attributes {stable_mosaic.version = 11 : i64} {
  func.func @mlp_kernel(%arg0: i32, %arg1: memref<16x80xf32, #tpu.memory_space<vmem>>, %arg2: memref<80x80xf32, #tpu.memory_space<vmem>>, %arg3: memref<1x80xf32, #tpu.memory_space<vmem>>, %arg4: memref<80x56xf32, #tpu.memory_space<vmem>>, %arg5: memref<1x56xf32, #tpu.memory_space<vmem>>, %arg6: memref<16x56xf32, #tpu.memory_space<vmem>>) attributes {dimension_semantics = [#tpu.dimension_semantics<parallel>], iteration_bounds = array<i64: 2>, scalar_prefetch = 0 : i64, scratch_operands = 0 : i64, tpu.core_type = #tpu.core_type<tc>, window_params = [{transform_indices = @transform_0, window_bounds = array<i64: 16, 80>}, {pipeline_mode = #tpu.pipeline_mode<synchronous>, transform_indices = @transform_1, window_bounds = array<i64: 80, 80>}, {pipeline_mode = #tpu.pipeline_mode<synchronous>, transform_indices = @transform_2, window_bounds = array<i64: 1, 80>}, {pipeline_mode = #tpu.pipeline_mode<synchronous>, transform_indices = @transform_3, window_bounds = array<i64: 80, 56>}, {pipeline_mode = #tpu.pipeline_mode<synchronous>, transform_indices = @transform_4, window_bounds = array<i64: 1, 56>}, {transform_indices = @transform_5, window_bounds = array<i64: 16, 56>}]} {
    %c0 = arith.constant 0 : index
    %c0_0 = arith.constant 0 : index
    %0 = vector.load %arg1[%c0, %c0_0] : memref<16x80xf32, #tpu.memory_space<vmem>>, vector<16x80xf32>
    %c0_1 = arith.constant 0 : index
    %c0_2 = arith.constant 0 : index
    %1 = vector.load %arg2[%c0_1, %c0_2] : memref<80x80xf32, #tpu.memory_space<vmem>>, vector<80x80xf32>
    %cst = arith.constant dense<0.000000e+00> : vector<16x80xf32>
    %2 = tpu.matmul %0, %1, %cst {dimension_numbers = #tpu.dot_dimension_numbers<[1], [0], [0], [1], [0, 0, 1, 1], [], []>} : vector<16x80xf32>, vector<80x80xf32>, vector<16x80xf32> -> vector<16x80xf32>
    %c0_3 = arith.constant 0 : index
    %c0_4 = arith.constant 0 : index
    %3 = vector.load %arg3[%c0_3, %c0_4] : memref<1x80xf32, #tpu.memory_space<vmem>>, vector<1x80xf32>
    %4 = vector.broadcast %3 : vector<1x80xf32> to vector<16x80xf32>
    %5 = arith.addf %2, %4 : vector<16x80xf32>
    %cst_5 = arith.constant 5.000000e-01 : f32
    %6 = vector.broadcast %cst_5 : f32 to vector<16x80xf32>
    %7 = arith.mulf %6, %5 : vector<16x80xf32>
    %8 = math.tanh %7 : vector<16x80xf32>
    %cst_6 = arith.constant 5.000000e-01 : f32
    %9 = vector.broadcast %cst_6 : f32 to vector<16x80xf32>
    %10 = arith.mulf %9, %8 : vector<16x80xf32>
    %cst_7 = arith.constant 5.000000e-01 : f32
    %11 = vector.broadcast %cst_7 : f32 to vector<16x80xf32>
    %12 = arith.addf %10, %11 : vector<16x80xf32>
    %c0_8 = arith.constant 0 : index
    %c0_9 = arith.constant 0 : index
    %13 = vector.load %arg4[%c0_8, %c0_9] : memref<80x56xf32, #tpu.memory_space<vmem>>, vector<80x56xf32>
    %cst_10 = arith.constant dense<0.000000e+00> : vector<16x56xf32>
    %14 = tpu.matmul %12, %13, %cst_10 {dimension_numbers = #tpu.dot_dimension_numbers<[1], [0], [0], [1], [0, 0, 1, 1], [], []>} : vector<16x80xf32>, vector<80x56xf32>, vector<16x56xf32> -> vector<16x56xf32>
    %c0_11 = arith.constant 0 : index
    %c0_12 = arith.constant 0 : index
    %15 = vector.load %arg5[%c0_11, %c0_12] : memref<1x56xf32, #tpu.memory_space<vmem>>, vector<1x56xf32>
    %16 = vector.broadcast %15 : vector<1x56xf32> to vector<16x56xf32>
    %17 = arith.addf %14, %16 : vector<16x56xf32>
    %cst_13 = arith.constant 5.000000e-01 : f32
    %18 = vector.broadcast %cst_13 : f32 to vector<16x56xf32>
    %19 = arith.mulf %18, %17 : vector<16x56xf32>
    %20 = math.tanh %19 : vector<16x56xf32>
    %cst_14 = arith.constant 5.000000e-01 : f32
    %21 = vector.broadcast %cst_14 : f32 to vector<16x56xf32>
    %22 = arith.mulf %21, %20 : vector<16x56xf32>
    %cst_15 = arith.constant 5.000000e-01 : f32
    %23 = vector.broadcast %cst_15 : f32 to vector<16x56xf32>
    %24 = arith.addf %22, %23 : vector<16x56xf32>
    %c0_16 = arith.constant 0 : index
    %c0_17 = arith.constant 0 : index
    %25 = vector.load %arg6[%c0_16, %c0_17] : memref<16x56xf32, #tpu.memory_space<vmem>>, vector<16x56xf32>
    tpu.vector_store %arg6[%c0_16, %c0_17], %24 {strides = array<i32>} : memref<16x56xf32, #tpu.memory_space<vmem>>, vector<16x56xf32>,
    return
  }
  func.func @transform_0(%arg0: i32) -> (i32, i32) {
    %c0_i32 = arith.constant 0 : i32
    %c0_i32_0 = arith.constant 0 : i32
    return %arg0, %c0_i32 : i32, i32
  }
  func.func @transform_1(%arg0: i32) -> (i32, i32) {
    %c0_i32 = arith.constant 0 : i32
    %c0_i32_0 = arith.constant 0 : i32
    %c0_i32_1 = arith.constant 0 : i32
    return %c0_i32, %c0_i32_0 : i32, i32
  }
  func.func @transform_2(%arg0: i32) -> (i32, i32) {
    %c0_i32 = arith.constant 0 : i32
    %c0_i32_0 = arith.constant 0 : i32
    %c0_i32_1 = arith.constant 0 : i32
    return %c0_i32, %c0_i32_0 : i32, i32
  }
  func.func @transform_3(%arg0: i32) -> (i32, i32) {
    %c0_i32 = arith.constant 0 : i32
    %c0_i32_0 = arith.constant 0 : i32
    %c0_i32_1 = arith.constant 0 : i32
    return %c0_i32, %c0_i32_0 : i32, i32
  }
  func.func @transform_4(%arg0: i32) -> (i32, i32) {
    %c0_i32 = arith.constant 0 : i32
    %c0_i32_0 = arith.constant 0 : i32
    %c0_i32_1 = arith.constant 0 : i32
    return %c0_i32, %c0_i32_0 : i32, i32
  }
  func.func @transform_5(%arg0: i32) -> (i32, i32) {
    %c0_i32 = arith.constant 0 : i32
    %c0_i32_0 = arith.constant 0 : i32
    return %arg0, %c0_i32 : i32, i32
  }
}

</mosaic_0001>

<llo_original>
// kernel: tile.13
$region0: #{tile.13}
  #allocation0 [shape = 's32[1]{0}', space=sflag, size = 0x4, scoped, tag = 'scoped memory for tile.13']
  %s0 = inlined_call_operand.vmem [shape: f32[10], index: 0, kind: input, shape index: {}]
  %s1 = inlined_call_operand.vmem [shape: f32[8,10], index: 1, kind: output, shape index: {}]
  // Predicated region
  $region2: #{tile.13} parent=0 // pred_check
    _
  $region3: #{tile.13} parent=0 // pred_check_branch
    %3 = sbr.rel (0) target = $region5
  $region4: #{tile.13} parent=0 // pred_region
    _
  $region5: #{tile.13} parent=0 // pred_fallthru
    _
  %v4 = vld [vmem:[%s0] ss:$0 sm:$0xff]
  %5 = vst [vmem:[%s1] sm:$0xff] %v4

// kernel: tile.14
$region0: #{tile.14}
  %s0 = inlined_call_operand.vmem [shape: f32[8,10], index: 0, kind: input, shape index: {}]
  %s1 = inlined_call_operand.vmem [shape: f32[1,80], index: 1, kind: output, shape index: {}]
  $region1: #{tile.14} parent=0
    #allocation0 [shape = 'u8[4096]{0}', space=vmem, size = 0x1000, scoped, tag = 'scoped mem for output reshape']
    %v2 = vld [vmem:[%s0] sm:$0x1]
    %vm3 = vcmask 80896
    %4 = vst.msk [vmem:[#allocation0] sm:$0x1] %vm3, %v2
    %s5 = scalar_lea.vmem %s0, 7
    %v6 = vld [vmem:[%s5] sm:$0x1]
    %7 = vrot.lane.b32.xlu0 %v6, 70
    %v8 = vpop.permute.xlu0 %7
    %vm9 = vcmask 654896
    %10 = vst.msk [vmem:[#allocation0] sm:$0x1] %vm9, %v8
    %s11 = scalar_lea.vmem %s0, 6
    %v12 = vld [vmem:[%s11] sm:$0x1]
    %13 = vrot.lane.b32.xlu0 %v12, 60
    %v14 = vpop.permute.xlu0 %13
    %vm15 = vcmask 572896
    %16 = vst.msk [vmem:[#allocation0] sm:$0x1] %vm15, %v14
    %s17 = scalar_lea.vmem %s0, 5
    %v18 = vld [vmem:[%s17] sm:$0x1]
    %19 = vrot.lane.b32.xlu0 %v18, 50
    %v20 = vpop.permute.xlu0 %19
    %vm21 = vcmask 490896
    %22 = vst.msk [vmem:[#allocation0] sm:$0x1] %vm21, %v20
    %s23 = scalar_lea.vmem %s0, 4
    %v24 = vld [vmem:[%s23] sm:$0x1]
    %25 = vrot.lane.b32.xlu0 %v24, 40
    %v26 = vpop.permute.xlu0 %25
    %vm27 = vcmask 408896
    %28 = vst.msk [vmem:[#allocation0] sm:$0x1] %vm27, %v26
    %s29 = scalar_lea.vmem %s0, 3
    %v30 = vld [vmem:[%s29] sm:$0x1]
    %31 = vrot.lane.b32.xlu0 %v30, 30
    %v32 = vpop.permute.xlu0 %31
    %vm33 = vcmask 326896
    %34 = vst.msk [vmem:[#allocation0] sm:$0x1] %vm33, %v32
    %s35 = scalar_lea.vmem %s0, 2
    %v36 = vld [vmem:[%s35] sm:$0x1]
    %37 = vrot.lane.b32.xlu0 %v36, 20
    %v38 = vpop.permute.xlu0 %37
    %vm39 = vcmask 244896
    %40 = vst.msk [vmem:[#allocation0] sm:$0x1] %vm39, %v38
    %s41 = scalar_lea.vmem %s0, 1
    %v42 = vld [vmem:[%s41] sm:$0x1]
    %43 = vrot.lane.b32.xlu0 %v42, 10
    %v44 = vpop.permute.xlu0 %43
    %vm45 = vcmask 162896
    %46 = vst.msk [vmem:[#allocation0] sm:$0x1] %vm45, %v44
    %s48 = ssub.s32 2, 1
    %v49 = vld [vmem:[#allocation0] sm:%s48]
    %s51 = ssub.s32 2, 1
    %52 = vst [vmem:[%s1] sm:%s51] %v49

// kernel: tile.18
$region0: #{tile.18}
  #allocation0 [shape = 's32[1]{0}', space=sflag, size = 0x4, scoped, tag = 'scoped memory for tile.18']
  %s0 = inlined_call_operand.vmem [shape: f32[7], index: 0, kind: input, shape index: {}]
  %s1 = inlined_call_operand.vmem [shape: f32[8,7], index: 1, kind: output, shape index: {}]
  // Predicated region
  $region2: #{tile.18} parent=0 // pred_check
    _
  $region3: #{tile.18} parent=0 // pred_check_branch
    %3 = sbr.rel (0) target = $region5
  $region4: #{tile.18} parent=0 // pred_region
    _
  $region5: #{tile.18} parent=0 // pred_fallthru
    _
  %v4 = vld [vmem:[%s0] ss:$0 sm:$0xff]
  %5 = vst [vmem:[%s1] sm:$0xff] %v4

// kernel: tile.19
$region0: #{tile.19}
  %s0 = inlined_call_operand.vmem [shape: f32[8,7], index: 0, kind: input, shape index: {}]
  %s1 = inlined_call_operand.vmem [shape: f32[1,56], index: 1, kind: output, shape index: {}]
  $region1: #{tile.19} parent=0
    #allocation0 [shape = 'u8[4096]{0}', space=vmem, size = 0x1000, scoped, tag = 'scoped mem for output reshape']
    %v2 = vld [vmem:[%s0] sm:$0x1]
    %vm3 = vcmask 56320
    %4 = vst.msk [vmem:[#allocation0] sm:$0x1] %vm3, %v2
    %s5 = scalar_lea.vmem %s0, 7
    %v6 = vld [vmem:[%s5] sm:$0x1]
    %7 = vrot.lane.b32.xlu0 %v6, 49
    %v8 = vpop.permute.xlu0 %7
    %vm9 = vcmask 458120
    %10 = vst.msk [vmem:[#allocation0] sm:$0x1] %vm9, %v8
    %s11 = scalar_lea.vmem %s0, 6
    %v12 = vld [vmem:[%s11] sm:$0x1]
    %13 = vrot.lane.b32.xlu0 %v12, 42
    %v14 = vpop.permute.xlu0 %13
    %vm15 = vcmask 400720
    %16 = vst.msk [vmem:[#allocation0] sm:$0x1] %vm15, %v14
    %s17 = scalar_lea.vmem %s0, 5
    %v18 = vld [vmem:[%s17] sm:$0x1]
    %19 = vrot.lane.b32.xlu0 %v18, 35
    %v20 = vpop.permute.xlu0 %19
    %vm21 = vcmask 343320
    %22 = vst.msk [vmem:[#allocation0] sm:$0x1] %vm21, %v20
    %s23 = scalar_lea.vmem %s0, 4
    %v24 = vld [vmem:[%s23] sm:$0x1]
    %25 = vrot.lane.b32.xlu0 %v24, 28
    %v26 = vpop.permute.xlu0 %25
    %vm27 = vcmask 285920
    %28 = vst.msk [vmem:[#allocation0] sm:$0x1] %vm27, %v26
    %s29 = scalar_lea.vmem %s0, 3
    %v30 = vld [vmem:[%s29] sm:$0x1]
    %31 = vrot.lane.b32.xlu0 %v30, 21
    %v32 = vpop.permute.xlu0 %31
    %vm33 = vcmask 228520
    %34 = vst.msk [vmem:[#allocation0] sm:$0x1] %vm33, %v32
    %s35 = scalar_lea.vmem %s0, 2
    %v36 = vld [vmem:[%s35] sm:$0x1]
    %37 = vrot.lane.b32.xlu0 %v36, 14
    %v38 = vpop.permute.xlu0 %37
    %vm39 = vcmask 171120
    %40 = vst.msk [vmem:[#allocation0] sm:$0x1] %vm39, %v38
    %s41 = scalar_lea.vmem %s0, 1
    %v42 = vld [vmem:[%s41] sm:$0x1]
    %43 = vrot.lane.b32.xlu0 %v42, 7
    %v44 = vpop.permute.xlu0 %43
    %vm45 = vcmask 113720
    %46 = vst.msk [vmem:[#allocation0] sm:$0x1] %vm45, %v44
    %s48 = ssub.s32 2, 1
    %v49 = vld [vmem:[#allocation0] sm:%s48]
    %s51 = ssub.s32 2, 1
    %52 = vst [vmem:[%s1] sm:%s51] %v49

// kernel: seven_segment_mlp.1
$region0: #{seven_segment_mlp.1}
  #allocation0 [shape = 'u32[]', space=smem, size = 0x4, offset = 0x4, fixed_abs, tag = 'smem constant byte address 0x4 - core index']
  #allocation1 [shape = 'u32[72,128]{1,0:T(1,128)}', space=vmem, size = 0x9000, scoped, tag = 'internal scratch']
  %s0 = inlined_call_operand.vmem [shape: f32[26,80], index: 0, kind: input, shape index: {}]
  %s1 = inlined_call_operand.vmem [shape: f32[80,80], index: 1, kind: input, shape index: {}]
  %s2 = inlined_call_operand.vmem [shape: f32[1,80], index: 2, kind: input, shape index: {}]
  %s3 = inlined_call_operand.vmem [shape: f32[80,56], index: 3, kind: input, shape index: {}]
  %s4 = inlined_call_operand.vmem [shape: f32[1,56], index: 4, kind: input, shape index: {}]
  %s5 = inlined_call_operand.vmem [shape: f32[26,56], index: 5, kind: output, shape index: {}]
  %s6 = sld [smem:[#allocation0]]
  $region53: #{seven_segment_mlp.1} parent=0
    _
  %s8 = ssub.s32 1, %s6
  %s9 = scalar_select 0, %s8, %s6
  loop: start=0, step=1, limit=4
  $region2: #{seven_segment_mlp.1} parent=0 // loop_pre_header
    _
  $region3: #{seven_segment_mlp.1} parent=0 // loop_header
    %s11 = sphi 0, %s15
    %p12 = scmp.ge.s32.totalorder %s11, 4
    %s21 = sphi 0, %s23
    %s24 = sphi 0, %s21
    %s25 = sphi 0, %s24
    %s41 = sphi 0, %s25
    %s45 = sphi 0, %s45
    %s47 = sphi 0, %s45
    %s48 = sphi 0, %s47
    %s62 = sphi 0, %s48
    %s66 = sphi 0, %s66
    %s68 = sphi 0, %s66
    %s69 = sphi 0, %s68
    %s83 = sphi 0, %s69
    %s87 = sphi 0, %s87
    %s89 = sphi 0, %s87
    %s90 = sphi 0, %s89
    %s104 = sphi 0, %s90
    %s108 = sphi 0, %s108
    %s110 = sphi 0, %s108
    %s111 = sphi 0, %s110
    %s125 = sphi 0, %s111
    %s131 = sphi 0, %s133
    %s134 = sphi 0, %s131
    %s135 = sphi 0, %s134
    %s151 = sphi 0, %s135
  $region4: #{seven_segment_mlp.1} parent=0 // loop_header_branch
    %14 = sbr.rel (%p12) target = $region8
  $region5: #{seven_segment_mlp.1} parent=0 // loop_body
    %s16 = ssub.s32 %s11, 1
    %s17 = ssub.s32 %s11, 2
    %s18 = sadd.s32 %s11, 1
    %s19 = ssub.s32 %s11, %s18
    %p20 = scmp.eq.s32.totalorder %s19, 0
    %s22 = sadd.s32 %s21, 1
    %s23 = scalar_select %p20, %s21, %s22
    %p26 = pneg %p20
    %p27 = scmp.eq.s32.totalorder %s11, 1
    %p28 = por %p26, %p27
    %p29 = scmp.ne.s32.totalorder %s21, %s24
    %p30 = scmp.eq.s32.totalorder %s11, 0
    %p31 = por %p29, %p30
    %p32 = scmp.ne.s32.totalorder %s21, %s24
    %p33 = scmp.eq.s32.totalorder %s16, 1
    %p34 = por %p32, %p33
    %p35 = scmp.ne.s32.totalorder %s24, %s25
    %p36 = scmp.eq.s32.totalorder %s16, 0
    %p37 = por %p35, %p36
    %p38 = scmp.ne.s32.totalorder %s24, %s25
    %p39 = scmp.eq.s32.totalorder %s17, 1
    %p40 = por %p38, %p39
    %p42 = scmp.ne.s32.totalorder %s25, %s41
    %p43 = scmp.eq.s32.totalorder %s17, 0
    %p44 = por %p42, %p43
    %s46 = sadd.s32 %s45, 1
    %p49 = scmp.eq.s32.totalorder %s11, 1
    %p50 = scmp.ne.s32.totalorder %s45, %s47
    %p51 = scmp.eq.s32.totalorder %s11, 0
    %p52 = por %p50, %p51
    %p53 = scmp.ne.s32.totalorder %s45, %s47
    %p54 = scmp.eq.s32.totalorder %s16, 1
    %p55 = por %p53, %p54
    %p56 = scmp.ne.s32.totalorder %s47, %s48
    %p57 = scmp.eq.s32.totalorder %s16, 0
    %p58 = por %p56, %p57
    %p59 = scmp.ne.s32.totalorder %s47, %s48
    %p60 = scmp.eq.s32.totalorder %s17, 1
    %p61 = por %p59, %p60
    %p63 = scmp.ne.s32.totalorder %s48, %s62
    %p64 = scmp.eq.s32.totalorder %s17, 0
    %p65 = por %p63, %p64
    %s67 = sadd.s32 %s66, 1
    %p70 = scmp.eq.s32.totalorder %s11, 1
    %p71 = scmp.ne.s32.totalorder %s66, %s68
    %p72 = scmp.eq.s32.totalorder %s11, 0
    %p73 = por %p71, %p72
    %p74 = scmp.ne.s32.totalorder %s66, %s68
    %p75 = scmp.eq.s32.totalorder %s16, 1
    %p76 = por %p74, %p75
    %p77 = scmp.ne.s32.totalorder %s68, %s69
    %p78 = scmp.eq.s32.totalorder %s16, 0
    %p79 = por %p77, %p78
    %p80 = scmp.ne.s32.totalorder %s68, %s69
    %p81 = scmp.eq.s32.totalorder %s17, 1
    %p82 = por %p80, %p81
    %p84 = scmp.ne.s32.totalorder %s69, %s83
    %p85 = scmp.eq.s32.totalorder %s17, 0
    %p86 = por %p84, %p85
    %s88 = sadd.s32 %s87, 1
    %p91 = scmp.eq.s32.totalorder %s11, 1
    %p92 = scmp.ne.s32.totalorder %s87, %s89
    %p93 = scmp.eq.s32.totalorder %s11, 0
    %p94 = por %p92, %p93
    %p95 = scmp.ne.s32.totalorder %s87, %s89
    %p96 = scmp.eq.s32.totalorder %s16, 1
    %p97 = por %p95, %p96
    %p98 = scmp.ne.s32.totalorder %s89, %s90
    %p99 = scmp.eq.s32.totalorder %s16, 0
    %p100 = por %p98, %p99
    %p101 = scmp.ne.s32.totalorder %s89, %s90
    %p102 = scmp.eq.s32.totalorder %s17, 1
    %p103 = por %p101, %p102
    %p105 = scmp.ne.s32.totalorder %s90, %s104
    %p106 = scmp.eq.s32.totalorder %s17, 0
    %p107 = por %p105, %p106
    %s109 = sadd.s32 %s108, 1
    %p112 = scmp.eq.s32.totalorder %s11, 1
    %p113 = scmp.ne.s32.totalorder %s108, %s110
    %p114 = scmp.eq.s32.totalorder %s11, 0
    %p115 = por %p113, %p114
    %p116 = scmp.ne.s32.totalorder %s108, %s110
    %p117 = scmp.eq.s32.totalorder %s16, 1
    %p118 = por %p116, %p117
    %p119 = scmp.ne.s32.totalorder %s110, %s111
    %p120 = scmp.eq.s32.totalorder %s16, 0
    %p121 = por %p119, %p120
    %p122 = scmp.ne.s32.totalorder %s110, %s111
    %p123 = scmp.eq.s32.totalorder %s17, 1
    %p124 = por %p122, %p123
    %p126 = scmp.ne.s32.totalorder %s111, %s125
    %p127 = scmp.eq.s32.totalorder %s17, 0
    %p128 = por %p126, %p127
    %s129 = ssub.s32 %s11, %s18
    %p130 = scmp.eq.s32.totalorder %s129, 0
    %s132 = sadd.s32 %s131, 1
    %s133 = scalar_select %p130, %s131, %s132
    %p136 = pneg %p130
    %p137 = scmp.eq.s32.totalorder %s11, 1
    %p138 = por %p136, %p137
    %p139 = scmp.ne.s32.totalorder %s131, %s134
    %p140 = scmp.eq.s32.totalorder %s11, 0
    %p141 = por %p139, %p140
    %p142 = scmp.ne.s32.totalorder %s131, %s134
    %p143 = scmp.eq.s32.totalorder %s16, 1
    %p144 = por %p142, %p143
    %p145 = scmp.ne.s32.totalorder %s134, %s135
    %p146 = scmp.eq.s32.totalorder %s16, 0
    %p147 = por %p145, %p146
    %p148 = scmp.ne.s32.totalorder %s134, %s135
    %p149 = scmp.eq.s32.totalorder %s17, 1
    %p150 = por %p148, %p149
    %p152 = scmp.ne.s32.totalorder %s135, %s151
    %p153 = scmp.eq.s32.totalorder %s17, 0
    %p154 = por %p152, %p153
    %p155 = scmp.le.s32.totalorder 1, %s11
    %p156 = scmp.lt.s32.totalorder %s11, 3
    %p157 = pnand %p155, %p156
    %p158 = pneg %p157
    // Predicated region
    $region9: #{seven_segment_mlp.1} parent=5 // pred_check
      _
    $region10: #{seven_segment_mlp.1} parent=5 // pred_check_branch
      %160 = sbr.rel (%p157) target = $region12
    $region11: #{seven_segment_mlp.1} parent=5 // pred_region
      %s161 = ssub.s32 %s11, 1
      // Predicated region
      $region13: #{seven_segment_mlp.1} parent=11 // pred_check
        %p162 = pneg %p58
      $region14: #{seven_segment_mlp.1} parent=11 // pred_check_branch
        %164 = sbr.rel (%p162) target = $region16
      $region15: #{seven_segment_mlp.1} parent=11 // pred_region
        _
      $region16: #{seven_segment_mlp.1} parent=11 // pred_fallthru
        _
      // Predicated region
      $region17: #{seven_segment_mlp.1} parent=11 // pred_check
        %p165 = pneg %p79
      $region18: #{seven_segment_mlp.1} parent=11 // pred_check_branch
        %167 = sbr.rel (%p165) target = $region20
      $region19: #{seven_segment_mlp.1} parent=11 // pred_region
        _
      $region20: #{seven_segment_mlp.1} parent=11 // pred_fallthru
        _
      // Predicated region
      $region21: #{seven_segment_mlp.1} parent=11 // pred_check
        %p168 = pneg %p100
      $region22: #{seven_segment_mlp.1} parent=11 // pred_check_branch
        %170 = sbr.rel (%p168) target = $region24
      $region23: #{seven_segment_mlp.1} parent=11 // pred_region
        _
      $region24: #{seven_segment_mlp.1} parent=11 // pred_fallthru
        _
      // Predicated region
      $region25: #{seven_segment_mlp.1} parent=11 // pred_check
        %p171 = pneg %p121
      $region26: #{seven_segment_mlp.1} parent=11 // pred_check_branch
        %173 = sbr.rel (%p171) target = $region28
      $region27: #{seven_segment_mlp.1} parent=11 // pred_region
        _
      $region28: #{seven_segment_mlp.1} parent=11 // pred_fallthru
        _
    $region12: #{seven_segment_mlp.1} parent=5 // pred_fallthru
      _
    %p174 = scmp.lt.s32.totalorder %s11, 2
    // Predicated region
    $region29: #{seven_segment_mlp.1} parent=5 // pred_check
      %p175 = pneg %p174
    $region30: #{seven_segment_mlp.1} parent=5 // pred_check_branch
      %177 = sbr.rel (%p175) target = $region32
    $region31: #{seven_segment_mlp.1} parent=5 // pred_region
      // Predicated region
      $region33: #{seven_segment_mlp.1} parent=31 // pred_check
        %p178 = pneg %p31
      $region34: #{seven_segment_mlp.1} parent=31 // pred_check_branch
        %180 = sbr.rel (%p178) target = $region36
      $region35: #{seven_segment_mlp.1} parent=31 // pred_region
        %s181 = smul.u32 2, %s11
        %p182 = scmp.lt.s32.totalorder %s181, 3
        %s183 = scalar_select %p182, %s181, 3
        %s184 = smul.addr %s183, 8
        %s185 = scalar_lea.vmem %s0, %s184
        %s186 = smul.u32 2, %s11
      $region36: #{seven_segment_mlp.1} parent=31 // pred_fallthru
        _
    $region32: #{seven_segment_mlp.1} parent=5 // pred_fallthru
      _
    %p187 = scmp.le.s32.totalorder 1, %s11
    %p188 = scmp.lt.s32.totalorder %s11, 3
    %p189 = pnand %p187, %p188
    %p190 = pneg %p189
    // Predicated region
    $region37: #{seven_segment_mlp.1} parent=5 // pred_check
      _
    $region38: #{seven_segment_mlp.1} parent=5 // pred_check_branch
      %192 = sbr.rel (%p189) target = $region40
    $region39: #{seven_segment_mlp.1} parent=5 // pred_region
      %s193 = ssub.s32 %s11, 1
      %s194 = smul.u32 2, %s16
      %p195 = scmp.lt.s32.totalorder %s194, 3
      %s196 = scalar_select %p195, %s194, 3
      %s197 = smul.addr %s196, 8
      %s198 = scalar_lea.vmem %s0, %s197
      %p199 = pneg %p37
      %p200 = pneg %p34
      %p201 = pneg %p58
      %p202 = pneg %p55
      %p203 = pneg %p79
      %p204 = pneg %p76
      %p205 = pneg %p100
      %p206 = pneg %p97
      %p207 = pneg %p121
      %p208 = pneg %p118
      %p209 = pneg %p147
      %p210 = pneg %p144
      %s211 = smul.u32 2, %s16
      %p212 = scmp.lt.s32.totalorder %s211, 3
      %s213 = scalar_select %p212, %s211, 3
      %s214 = smul.addr %s213, 8
      %s215 = scalar_lea.vmem %s5, %s214
      %s216 = smul.u32 2, %s16
      %p217 = scmp.lt.s32.totalorder %s216, 3
      %s218 = scalar_select %p217, %s216, 3
      %s219 = smul.addr %s218, 8
      %s220 = scalar_lea.vmem %s0, %s219
      %s221 = smul.u32 2, %s16
      %s222 = smul.u32 2, %s16
      %p223 = scmp.lt.s32.totalorder %s222, 3
      %s224 = scalar_select %p223, %s222, 3
      %s225 = smul.addr %s224, 8
      %s226 = scalar_lea.vmem %s5, %s225
      %s227 = smul.u32 2, %s16
      %v228 = vld [vmem:[%s220] sm:$0xff]
      %v229 = vld [vmem:[%s220 + $0x8] sm:$0xff]
      %v230 = vld [vmem:[%s1] sm:$0xff]
      %v231 = vld [vmem:[%s1 + $0x8] sm:$0xff]
      %v232 = vld [vmem:[%s1 + $0x10] sm:$0xff]
      %v233 = vld [vmem:[%s1 + $0x18] sm:$0xff]
      %v234 = vld [vmem:[%s1 + $0x20] sm:$0xff]
      %v235 = vld [vmem:[%s1 + $0x28] sm:$0xff]
      %v236 = vld [vmem:[%s1 + $0x30] sm:$0xff]
      %v237 = vld [vmem:[%s1 + $0x38] sm:$0xff]
      %v238 = vld [vmem:[%s1 + $0x40] sm:$0xff]
      %v239 = vld [vmem:[%s1 + $0x48] sm:$0xff]
      %v240 = vld [vmem:[%s2] sm:$0x1]
      %v242 = vperm.slane %v240, 0
      %vm244 = vcmask 654336
      %v246 = vsel %vm244, %v228, 0
      %v249 = vsel %vm244, %v229, 0
      %251 = vmatpush.msra.mxu0 0.0
      %252 = vmatpush.msra.mxu0 0.0
      %253 = vmatpush.msra.mxu0 0.0
      %254 = vmatpush.msra.mxu0 0.0
      %255 = vmatpush.msra.mxu0 0.0
      %256 = vmatpush.msra.mxu0 0.0
      %257 = vmatpush.msra.mxu0 %v239
      %258 = vmatpush.msra.mxu0 %v238
      %259 = vmatpush.msra.mxu0 %v237
      %260 = vmatpush.msra.mxu0 %v236
      %261 = vmatpush.msra.mxu0 %v235
      %262 = vmatpush.msra.mxu0 %v234
      %263 = vmatpush.msra.mxu0 %v233
      %264 = vmatpush.msra.mxu0 %v232
      %265 = vmatpush.msra.mxu0 %v231
      %266 = vmatpush.msra.mxu0 %v230
      %267 = vmatmul.f32.gmra.mxu0 %v246
      %v268 = vpop.f32.mrf.mxu0
      %v269 = vadd.f32 %v242, %v268
      %270 = vmatmul.f32.gmra.mxu0 %v249
      %v271 = vpop.f32.mrf.mxu0
      %v272 = vadd.f32 %v242, %v271
      %273 = vdwg.mxu0
      %v274 = vmul.f32 %v269, 0.5
      %v275 = vmul.f32 %v272, 0.5
      %v276 = vtanh.pop %v274
      %v277 = vtanh.pop %v275
      %v278 = vmul.f32 %v276, 0.5
      %v279 = vmul.f32 %v277, 0.5
      %v280 = vadd.f32 %v278, 0.5
      %v281 = vadd.f32 %v279, 0.5
      %v282 = vld [vmem:[%s3] sm:$0xff]
      %v283 = vld [vmem:[%s3 + $0x8] sm:$0xff]
      %v284 = vld [vmem:[%s3 + $0x10] sm:$0xff]
      %v285 = vld [vmem:[%s3 + $0x18] sm:$0xff]
      %v286 = vld [vmem:[%s3 + $0x20] sm:$0xff]
      %v287 = vld [vmem:[%s3 + $0x28] sm:$0xff]
      %v288 = vld [vmem:[%s3 + $0x30] sm:$0xff]
      %v289 = vld [vmem:[%s3 + $0x38] sm:$0xff]
      %v290 = vld [vmem:[%s3 + $0x40] sm:$0xff]
      %v291 = vld [vmem:[%s3 + $0x48] sm:$0xff]
      %v292 = vld [vmem:[%s4] sm:$0x1]
      %v294 = vperm.slane %v292, 0
      %v297 = vsel %vm244, %v280, 0
      %v300 = vsel %vm244, %v281, 0
      %302 = vmatpush.msra.mxu0 0.0
      %303 = vmatpush.msra.mxu0 0.0
      %304 = vmatpush.msra.mxu0 0.0
      %305 = vmatpush.msra.mxu0 0.0
      %306 = vmatpush.msra.mxu0 0.0
      %307 = vmatpush.msra.mxu0 0.0
      %308 = vmatpush.msra.mxu0 %v291
      %309 = vmatpush.msra.mxu0 %v290
      %310 = vmatpush.msra.mxu0 %v289
      %311 = vmatpush.msra.mxu0 %v288
      %312 = vmatpush.msra.mxu0 %v287
      %313 = vmatpush.msra.mxu0 %v286
      %314 = vmatpush.msra.mxu0 %v285
      %315 = vmatpush.msra.mxu0 %v284
      %316 = vmatpush.msra.mxu0 %v283
      %317 = vmatpush.msra.mxu0 %v282
      %318 = vmatmul.f32.gmra.mxu0 %v297
      %v319 = vpop.f32.mrf.mxu0
      %v320 = vadd.f32 %v294, %v319
      %321 = vmatmul.f32.gmra.mxu0 %v300
      %v322 = vpop.f32.mrf.mxu0
      %v323 = vadd.f32 %v294, %v322
      %324 = vdwg.mxu0
      %v325 = vmul.f32 %v320, 0.5
      %v326 = vmul.f32 %v323, 0.5
      %v327 = vtanh.pop %v325
      %v328 = vtanh.pop %v326
      %v329 = vmul.f32 %v327, 0.5
      %v330 = vmul.f32 %v328, 0.5
      %v331 = vadd.f32 %v329, 0.5
      %v332 = vadd.f32 %v330, 0.5
      %vm333 = vcmask 457728
      %334 = vst.msk [vmem:[%s226] sm:$0xff] %vm333, %v331
      %335 = vst.msk [vmem:[%s226 + $0x8] sm:$0xff] %vm333, %v332
      %s336 = smul.u32 2, %s16
      %p337 = scmp.lt.s32.totalorder %s336, 3
      %s338 = scalar_select %p337, %s336, 3
      %s339 = smul.addr %s338, 8
      %s340 = scalar_lea.vmem %s5, %s339
      // Predicated region
      $region41: #{seven_segment_mlp.1} parent=39 // pred_check
        %p341 = pneg %p144
      $region42: #{seven_segment_mlp.1} parent=39 // pred_check_branch
        %343 = sbr.rel (%p341) target = $region44
      $region43: #{seven_segment_mlp.1} parent=39 // pred_region
        %s344 = smul.u32 2, %s16
      $region44: #{seven_segment_mlp.1} parent=39 // pred_fallthru
        _
    $region40: #{seven_segment_mlp.1} parent=5 // pred_fallthru
      _
    %p345 = scmp.le.s32.totalorder 2, %s11
    // Predicated region
    $region45: #{seven_segment_mlp.1} parent=5 // pred_check
      %p346 = pneg %p345
    $region46: #{seven_segment_mlp.1} parent=5 // pred_check_branch
      %348 = sbr.rel (%p346) target = $region48
    $region47: #{seven_segment_mlp.1} parent=5 // pred_region
      %s349 = ssub.s32 %s11, 2
      // Predicated region
      $region49: #{seven_segment_mlp.1} parent=47 // pred_check
        %p350 = pneg %p150
      $region50: #{seven_segment_mlp.1} parent=47 // pred_check_branch
        %352 = sbr.rel (%p350) target = $region52
      $region51: #{seven_segment_mlp.1} parent=47 // pred_region
        %s353 = smul.u32 2, %s17
        %p354 = scmp.lt.s32.totalorder %s353, 3
        %s355 = scalar_select %p354, %s353, 3
        %s356 = smul.addr %s355, 8
        %s357 = scalar_lea.vmem %s5, %s356
      $region52: #{seven_segment_mlp.1} parent=47 // pred_fallthru
        _
    $region48: #{seven_segment_mlp.1} parent=5 // pred_fallthru
      _
  $region6: #{seven_segment_mlp.1} parent=0 // loop_footer
    %s15 = sadd.s32 1, %s11
  $region7: #{seven_segment_mlp.1} parent=0 // loop_footer_branch
    %10 = sbr.rel target = $region3
  $region8: #{seven_segment_mlp.1} parent=0 // loop_exit
    _

</llo_original>
